<compile_context>
chip_gen: v7x
topology: tpu7x:2x2x1
jax: 0.10.0
libtpu: 0.0.40
codegen_flags: <defaults>
</compile_context>

<pallas_src>
import jax
import jax.numpy as jnp
from jax.experimental import pallas as pl
from jax.experimental.pallas import tpu as pltpu

MARGIN = 1.0


def _sum_all_2d(x):
    # (R, C) -> (1, 1); lane reduce then sublane reduce, keepdims throughout.
    return jnp.sum(jnp.sum(x, axis=1, keepdims=True), axis=0, keepdims=True)


def _hinge_term(dist):
    # ((m - sqrt(d)) / m)^2 * max(m - sqrt(d), 0)^2, elementwise.
    sd = jnp.sqrt(jnp.maximum(dist, 0.0))
    h = MARGIN - sd
    t1 = h * (1.0 / MARGIN)
    t2 = jnp.maximum(h, 0.0)
    return (t1 * t1) * (t2 * t2)


def _global_contrastive_kernel(mask_ref, feat_ref, proto_ref, out_ref):
    x = feat_ref[...]          # (C, F) f32
    p = proto_ref[...]         # (C, F) f32 (already detached in the wrapper)
    mask_i = mask_ref[...]     # (C, 1) f32, 1.0 where the class is present

    C, F = x.shape
    inv_f = 1.0 / float(F)     # mean over the feature dim

    # --- prototype non-empty mask (prototypes[j].sum() != 0), exact f32 column
    p_row_sum = jnp.sum(p, axis=1, keepdims=True)                      # (C, 1)
    mask_j_col = (p_row_sum != 0.0).astype(jnp.float32)                # (C, 1)

    # --- intra loss: diagonal (i == j) terms, exact f32 ----------------------
    d = x - p
    d_diag = jnp.sum(d * d, axis=1, keepdims=True) * inv_f             # (C, 1)
    diag_mask = mask_i * mask_j_col                                    # (C, 1)
    intra_sum = _sum_all_2d(diag_mask * d_diag)                        # (1, 1)
    intra_cnt = _sum_all_2d(diag_mask)                                 # (1, 1)
    intra = intra_sum / (intra_cnt + 1e-10)                            # exact div

    # --- inter loss: Gram-form pairwise distances, bf16 operands on the MXU --
    nt = (((1,), (1,)), ((), ()))      # contract both operands on the feature dim
    x_bf = x.astype(jnp.bfloat16)
    p_bf = p.astype(jnp.bfloat16)
    gram = jax.lax.dot_general(x_bf, p_bf, nt,
                               preferred_element_type=jnp.float32)     # (C, C)

    # lane-major (1, C) rows via tiny ones-matmuls (avoids an XLU transpose)
    ones8 = jnp.ones((8, F), jnp.bfloat16)
    p_sq_row = jax.lax.dot_general(ones8, (p * p).astype(jnp.bfloat16), nt,
                                   preferred_element_type=jnp.float32)[0:1, :]
    p_sum_row = jax.lax.dot_general(ones8, p_bf, nt,
                                    preferred_element_type=jnp.float32)[0:1, :]
    mask_j_row = (p_sum_row != 0.0).astype(jnp.float32)                # (1, C)

    x_sq = jnp.sum(x * x, axis=1, keepdims=True)                       # (C, 1) exact
    dist = (x_sq + p_sq_row - 2.0 * gram) * inv_f                      # (C, C)
    inter_term = _hinge_term(dist)                                     # (C, C)

    # masked sum over all (i, j) (includes the diagonal), then subtract the
    # diagonal contribution reconstructed from the exact d_diag.  Counts are
    # analytic: n_i * n_j - n_diag  — no (C, C) iotas or extra (C, C) reduces.
    full_sum = _sum_all_2d(inter_term * mask_i * mask_j_row)           # (1, 1)
    diag_sum = _sum_all_2d(diag_mask * _hinge_term(d_diag))            # (1, 1)
    inter_sum = full_sum - diag_sum

    n_i = _sum_all_2d(mask_i)
    n_j = _sum_all_2d(mask_j_col)
    inter_cnt = n_i * n_j - intra_cnt
    inter = inter_sum / (inter_cnt + 1e-10)                            # exact div

    # --- scalar writeback: zeroed tile + two element stores -------------------
    out_ref[...] = jnp.zeros_like(out_ref)
    out_ref[0:1, 0:1] = intra
    out_ref[0:1, 1:2] = inter


def global_contrastive_loss(cls_features, prototypes, annotations, steps=None,
                            *, num_classes):
    """Forward pass of GlobalContrastiveLoss. Returns (intra_loss, inter_loss)."""
    del steps  # unused, mirrors the torch forward signature
    C, F = cls_features.shape
    assert C == num_classes
    assert prototypes.shape == (C, F)

    # glue (plain JAX, outside the kernel): detach prototypes, build the
    # class-presence mask from the annotation class ids (-1 pads never match).
    prototypes = jax.lax.stop_gradient(prototypes)
    x = cls_features.astype(jnp.float32)
    p = prototypes.astype(jnp.float32)

    labels = annotations[:, :, 4].astype(jnp.int32)                    # (B, N)
    cls_ids = jnp.arange(C, dtype=jnp.int32)
    present = jnp.any(labels[:, :, None] == cls_ids[None, None, :], axis=(0, 1))
    mask_i = present.astype(jnp.float32).reshape(C, 1)                 # (C, 1)

    # VMEM budget: f32 inputs, bf16 matmul operand copies, a handful of (C, C)
    # f32 temporaries and the (8, 128) output; capped at 75% of physical VMEM
    # (~48 MiB on v7x, ~96 MiB on v5e/v6e) to leave compiler-scratch headroom.
    try:
        vmem_cap = int(pltpu.get_tpu_info().vmem_capacity_bytes)
    except Exception:  # conservative fallback if the query is unavailable
        vmem_cap = 64 << 20
    vmem_cap = (vmem_cap * 3) // 4
    need = 4 * (2 * C * F + C + 6 * C * C + 8 * 128) + 2 * (2 * C * F) + (2 << 20)
    vmem_bytes = int(min(max(need, 4 << 20), vmem_cap))

    cost = pl.CostEstimate(
        flops=2 * C * C * F + 2 * 2 * 8 * C * F + 10 * C * F + 16 * C * C,
        transcendentals=C * C + C + 2,
        bytes_accessed=4 * (2 * C * F + C + 8 * 128),
    )

    out = pl.pallas_call(
        _global_contrastive_kernel,
        out_shape=jax.ShapeDtypeStruct((8, 128), jnp.float32),
        in_specs=[pl.BlockSpec(memory_space=pltpu.MemorySpace.VMEM)] * 3,
        out_specs=pl.BlockSpec(memory_space=pltpu.MemorySpace.VMEM),
        compiler_params=pltpu.CompilerParams(vmem_limit_bytes=vmem_bytes),
        cost_estimate=cost,
    )(mask_i, x, p)

    return out[0, 0], out[0, 1]


if __name__ == "__main__":
    key = jax.random.PRNGKey(0)
    num_classes, feat_dim = 8, 32
    batch, num_ann = 2, 4

    k1, k2, k3 = jax.random.split(key, 3)
    cls_features = jax.random.normal(k1, (num_classes, feat_dim), dtype=jnp.float32)
    prototypes = jax.random.normal(k2, (num_classes, feat_dim), dtype=jnp.float32)
    prototypes = prototypes.at[5].set(0.0)          # one empty prototype -> skipped

    labels = jax.random.randint(k3, (batch, num_ann), 0, num_classes)
    labels = labels.at[1, 3].set(-1)                # padded annotation -> ignored
    annotations = jnp.zeros((batch, num_ann, 5), jnp.float32)
    annotations = annotations.at[:, :, 4].set(labels.astype(jnp.float32))

    fn = jax.jit(lambda f, p, a: global_contrastive_loss(
        f, p, a, 0, num_classes=num_classes))
    intra, inter = fn(cls_features, prototypes, annotations)
    jax.block_until_ready((intra, inter))
    print("KERNEL_OK")
</pallas_src>

<mosaic_0001>
module attributes {stable_mosaic.version = 11 : i64} {
  func.func @_global_contrastive_kernel(%arg0: memref<8x1xf32, #tpu.memory_space<vmem>>, %arg1: memref<8x32xf32, #tpu.memory_space<vmem>>, %arg2: memref<8x32xf32, #tpu.memory_space<vmem>>, %arg3: memref<8x128xf32, #tpu.memory_space<vmem>>) attributes {dimension_semantics = [], scalar_prefetch = 0 : i64, scratch_operands = 0 : i64, tpu.core_type = #tpu.core_type<tc>} {
    %c0 = arith.constant 0 : index
    %c0_0 = arith.constant 0 : index
    %0 = vector.load %arg1[%c0, %c0_0] : memref<8x32xf32, #tpu.memory_space<vmem>>, vector<8x32xf32>
    %c0_1 = arith.constant 0 : index
    %c0_2 = arith.constant 0 : index
    %1 = vector.load %arg2[%c0_1, %c0_2] : memref<8x32xf32, #tpu.memory_space<vmem>>, vector<8x32xf32>
    %c0_3 = arith.constant 0 : index
    %c0_4 = arith.constant 0 : index
    %2 = vector.load %arg0[%c0_3, %c0_4] : memref<8x1xf32, #tpu.memory_space<vmem>>, vector<8x1xf32>
    %cst = arith.constant dense<0.000000e+00> : vector<8xf32>
    %3 = vector.multi_reduction <add>, %1, %cst [1] : vector<8x32xf32> to vector<8xf32>
    %4 = vector.shape_cast %3 : vector<8xf32> to vector<8x1xf32>
    %cst_5 = arith.constant 0.000000e+00 : f32
    %5 = vector.broadcast %cst_5 : f32 to vector<8x1xf32>
    %6 = arith.cmpf one, %4, %5 : vector<8x1xf32>
    %7 = arith.extui %6 : vector<8x1xi1> to vector<8x1xi32>
    %8 = arith.sitofp %7 : vector<8x1xi32> to vector<8x1xf32>
    %9 = arith.subf %0, %1 : vector<8x32xf32>
    %10 = arith.mulf %9, %9 : vector<8x32xf32>
    %cst_6 = arith.constant dense<0.000000e+00> : vector<8xf32>
    %11 = vector.multi_reduction <add>, %10, %cst_6 [1] : vector<8x32xf32> to vector<8xf32>
    %12 = vector.shape_cast %11 : vector<8xf32> to vector<8x1xf32>
    %cst_7 = arith.constant 3.125000e-02 : f32
    %13 = vector.broadcast %cst_7 : f32 to vector<8x1xf32>
    %14 = arith.mulf %12, %13 : vector<8x1xf32>
    %15 = arith.mulf %2, %8 : vector<8x1xf32>
    %16 = arith.mulf %15, %14 : vector<8x1xf32>
    %cst_8 = arith.constant dense<0.000000e+00> : vector<8xf32>
    %17 = vector.multi_reduction <add>, %16, %cst_8 [1] : vector<8x1xf32> to vector<8xf32>
    %18 = vector.shape_cast %17 : vector<8xf32> to vector<8x1xf32>
    %cst_9 = arith.constant dense<0.000000e+00> : vector<1xf32>
    %19 = vector.multi_reduction <add>, %18, %cst_9 [0] : vector<8x1xf32> to vector<1xf32>
    %20 = vector.shape_cast %19 : vector<1xf32> to vector<1x1xf32>
    %cst_10 = arith.constant dense<0.000000e+00> : vector<8xf32>
    %21 = vector.multi_reduction <add>, %15, %cst_10 [1] : vector<8x1xf32> to vector<8xf32>
    %22 = vector.shape_cast %21 : vector<8xf32> to vector<8x1xf32>
    %cst_11 = arith.constant dense<0.000000e+00> : vector<1xf32>
    %23 = vector.multi_reduction <add>, %22, %cst_11 [0] : vector<8x1xf32> to vector<1xf32>
    %24 = vector.shape_cast %23 : vector<1xf32> to vector<1x1xf32>
    %cst_12 = arith.constant 1.000000e-10 : f32
    %25 = vector.broadcast %cst_12 : f32 to vector<1x1xf32>
    %26 = arith.addf %24, %25 : vector<1x1xf32>
    %27 = arith.divf %20, %26 : vector<1x1xf32>
    %28 = arith.truncf %0 : vector<8x32xf32> to vector<8x32xbf16>
    %29 = arith.truncf %1 : vector<8x32xf32> to vector<8x32xbf16>
    %cst_13 = arith.constant dense<0.000000e+00> : vector<8x8xf32>
    %30 = tpu.matmul %28, %29, %cst_13 {dimension_numbers = #tpu.dot_dimension_numbers<[1], [1], [0], [0], [0, 0, 1, 0], [], []>} : vector<8x32xbf16>, vector<8x32xbf16>, vector<8x8xf32> -> vector<8x8xf32>
    %cst_14 = arith.constant 1.000000e+00 : bf16
    %31 = vector.broadcast %cst_14 : bf16 to vector<8x32xbf16>
    %32 = arith.mulf %1, %1 : vector<8x32xf32>
    %33 = arith.truncf %32 : vector<8x32xf32> to vector<8x32xbf16>
    %cst_15 = arith.constant dense<0.000000e+00> : vector<8x8xf32>
    %34 = tpu.matmul %31, %33, %cst_15 {dimension_numbers = #tpu.dot_dimension_numbers<[1], [1], [0], [0], [0, 0, 1, 0], [], []>} : vector<8x32xbf16>, vector<8x32xbf16>, vector<8x8xf32> -> vector<8x8xf32>
    %35 = vector.extract_strided_slice %34 {offsets = [0, 0], sizes = [1, 8], strides = [1, 1]} : vector<8x8xf32> to vector<1x8xf32>
    %cst_16 = arith.constant dense<0.000000e+00> : vector<8x8xf32>
    %36 = tpu.matmul %31, %29, %cst_16 {dimension_numbers = #tpu.dot_dimension_numbers<[1], [1], [0], [0], [0, 0, 1, 0], [], []>} : vector<8x32xbf16>, vector<8x32xbf16>, vector<8x8xf32> -> vector<8x8xf32>
    %37 = vector.extract_strided_slice %36 {offsets = [0, 0], sizes = [1, 8], strides = [1, 1]} : vector<8x8xf32> to vector<1x8xf32>
    %cst_17 = arith.constant 0.000000e+00 : f32
    %38 = vector.broadcast %cst_17 : f32 to vector<1x8xf32>
    %39 = arith.cmpf one, %37, %38 : vector<1x8xf32>
    %40 = arith.extui %39 : vector<1x8xi1> to vector<1x8xi32>
    %41 = arith.sitofp %40 : vector<1x8xi32> to vector<1x8xf32>
    %42 = arith.mulf %0, %0 : vector<8x32xf32>
    %cst_18 = arith.constant dense<0.000000e+00> : vector<8xf32>
    %43 = vector.multi_reduction <add>, %42, %cst_18 [1] : vector<8x32xf32> to vector<8xf32>
    %44 = vector.shape_cast %43 : vector<8xf32> to vector<8x1xf32>
    %45 = vector.broadcast %44 : vector<8x1xf32> to vector<8x8xf32>
    %46 = vector.broadcast %35 : vector<1x8xf32> to vector<8x8xf32>
    %47 = arith.addf %45, %46 : vector<8x8xf32>
    %cst_19 = arith.constant 2.000000e+00 : f32
    %48 = vector.broadcast %cst_19 : f32 to vector<8x8xf32>
    %49 = arith.mulf %48, %30 : vector<8x8xf32>
    %50 = arith.subf %47, %49 : vector<8x8xf32>
    %cst_20 = arith.constant 3.125000e-02 : f32
    %51 = vector.broadcast %cst_20 : f32 to vector<8x8xf32>
    %52 = arith.mulf %50, %51 : vector<8x8xf32>
    %cst_21 = arith.constant 0.000000e+00 : f32
    %53 = vector.broadcast %cst_21 : f32 to vector<8x8xf32>
    %54 = arith.maximumf %52, %53 : vector<8x8xf32>
    %55 = math.sqrt %54 : vector<8x8xf32>
    %cst_22 = arith.constant 1.000000e+00 : f32
    %56 = vector.broadcast %cst_22 : f32 to vector<8x8xf32>
    %57 = arith.subf %56, %55 : vector<8x8xf32>
    %cst_23 = arith.constant 1.000000e+00 : f32
    %58 = vector.broadcast %cst_23 : f32 to vector<8x8xf32>
    %59 = arith.mulf %57, %58 : vector<8x8xf32>
    %cst_24 = arith.constant 0.000000e+00 : f32
    %60 = vector.broadcast %cst_24 : f32 to vector<8x8xf32>
    %61 = arith.maximumf %57, %60 : vector<8x8xf32>
    %62 = arith.mulf %59, %59 : vector<8x8xf32>
    %63 = arith.mulf %61, %61 : vector<8x8xf32>
    %64 = arith.mulf %62, %63 : vector<8x8xf32>
    %65 = vector.broadcast %2 : vector<8x1xf32> to vector<8x8xf32>
    %66 = arith.mulf %64, %65 : vector<8x8xf32>
    %67 = vector.broadcast %41 : vector<1x8xf32> to vector<8x8xf32>
    %68 = arith.mulf %66, %67 : vector<8x8xf32>
    %cst_25 = arith.constant dense<0.000000e+00> : vector<8xf32>
    %69 = vector.multi_reduction <add>, %68, %cst_25 [1] : vector<8x8xf32> to vector<8xf32>
    %70 = vector.shape_cast %69 : vector<8xf32> to vector<8x1xf32>
    %cst_26 = arith.constant dense<0.000000e+00> : vector<1xf32>
    %71 = vector.multi_reduction <add>, %70, %cst_26 [0] : vector<8x1xf32> to vector<1xf32>
    %72 = vector.shape_cast %71 : vector<1xf32> to vector<1x1xf32>
    %cst_27 = arith.constant 0.000000e+00 : f32
    %73 = vector.broadcast %cst_27 : f32 to vector<8x1xf32>
    %74 = arith.maximumf %14, %73 : vector<8x1xf32>
    %75 = math.sqrt %74 : vector<8x1xf32>
    %cst_28 = arith.constant 1.000000e+00 : f32
    %76 = vector.broadcast %cst_28 : f32 to vector<8x1xf32>
    %77 = arith.subf %76, %75 : vector<8x1xf32>
    %cst_29 = arith.constant 1.000000e+00 : f32
    %78 = vector.broadcast %cst_29 : f32 to vector<8x1xf32>
    %79 = arith.mulf %77, %78 : vector<8x1xf32>
    %cst_30 = arith.constant 0.000000e+00 : f32
    %80 = vector.broadcast %cst_30 : f32 to vector<8x1xf32>
    %81 = arith.maximumf %77, %80 : vector<8x1xf32>
    %82 = arith.mulf %79, %79 : vector<8x1xf32>
    %83 = arith.mulf %81, %81 : vector<8x1xf32>
    %84 = arith.mulf %82, %83 : vector<8x1xf32>
    %85 = arith.mulf %15, %84 : vector<8x1xf32>
    %cst_31 = arith.constant dense<0.000000e+00> : vector<8xf32>
    %86 = vector.multi_reduction <add>, %85, %cst_31 [1] : vector<8x1xf32> to vector<8xf32>
    %87 = vector.shape_cast %86 : vector<8xf32> to vector<8x1xf32>
    %cst_32 = arith.constant dense<0.000000e+00> : vector<1xf32>
    %88 = vector.multi_reduction <add>, %87, %cst_32 [0] : vector<8x1xf32> to vector<1xf32>
    %89 = vector.shape_cast %88 : vector<1xf32> to vector<1x1xf32>
    %90 = arith.subf %72, %89 : vector<1x1xf32>
    %cst_33 = arith.constant dense<0.000000e+00> : vector<8xf32>
    %91 = vector.multi_reduction <add>, %2, %cst_33 [1] : vector<8x1xf32> to vector<8xf32>
    %92 = vector.shape_cast %91 : vector<8xf32> to vector<8x1xf32>
    %cst_34 = arith.constant dense<0.000000e+00> : vector<1xf32>
    %93 = vector.multi_reduction <add>, %92, %cst_34 [0] : vector<8x1xf32> to vector<1xf32>
    %94 = vector.shape_cast %93 : vector<1xf32> to vector<1x1xf32>
    %cst_35 = arith.constant dense<0.000000e+00> : vector<8xf32>
    %95 = vector.multi_reduction <add>, %8, %cst_35 [1] : vector<8x1xf32> to vector<8xf32>
    %96 = vector.shape_cast %95 : vector<8xf32> to vector<8x1xf32>
    %cst_36 = arith.constant dense<0.000000e+00> : vector<1xf32>
    %97 = vector.multi_reduction <add>, %96, %cst_36 [0] : vector<8x1xf32> to vector<1xf32>
    %98 = vector.shape_cast %97 : vector<1xf32> to vector<1x1xf32>
    %99 = arith.mulf %94, %98 : vector<1x1xf32>
    %100 = arith.subf %99, %24 : vector<1x1xf32>
    %cst_37 = arith.constant 1.000000e-10 : f32
    %101 = vector.broadcast %cst_37 : f32 to vector<1x1xf32>
    %102 = arith.addf %100, %101 : vector<1x1xf32>
    %103 = arith.divf %90, %102 : vector<1x1xf32>
    %cst_38 = arith.constant 0.000000e+00 : f32
    %104 = vector.broadcast %cst_38 : f32 to vector<8x128xf32>
    %c0_39 = arith.constant 0 : index
    %c0_40 = arith.constant 0 : index
    %105 = vector.load %arg3[%c0_39, %c0_40] : memref<8x128xf32, #tpu.memory_space<vmem>>, vector<8x128xf32>
    tpu.vector_store %arg3[%c0_39, %c0_40], %104 {strides = array<i32>} : memref<8x128xf32, #tpu.memory_space<vmem>>, vector<8x128xf32>,
    %c0_41 = arith.constant 0 : index
    %c0_42 = arith.constant 0 : index
    %106 = vector.load %arg3[%c0_41, %c0_42] : memref<8x128xf32, #tpu.memory_space<vmem>>, vector<1x1xf32>
    tpu.vector_store %arg3[%c0_41, %c0_42], %27 {strides = array<i32>} : memref<8x128xf32, #tpu.memory_space<vmem>>, vector<1x1xf32>,
    %c0_43 = arith.constant 0 : index
    %c1 = arith.constant 1 : index
    %107 = vector.load %arg3[%c0_43, %c1] : memref<8x128xf32, #tpu.memory_space<vmem>>, vector<1x1xf32>
    tpu.vector_store %arg3[%c0_43, %c1], %103 {strides = array<i32>} : memref<8x128xf32, #tpu.memory_space<vmem>>, vector<1x1xf32>,
    return
  }
}

</mosaic_0001>

<llo_original>
// kernel: _lambda_.1
$region0: #{_lambda_.1}
  #allocation0 [shape = 'u32[]', space=smem, size = 0x4, offset = 0x4, fixed_abs, tag = 'smem constant byte address 0x4 - core index']
  #allocation1 [shape = 'u32[144,128]{1,0:T(1,128)}', space=vmem, size = 0x12000, scoped, tag = 'internal scratch']
  %s0 = inlined_call_operand.vmem [shape: f32[8,1], index: 0, kind: input, shape index: {}]
  %s1 = inlined_call_operand.vmem [shape: f32[8,32], index: 1, kind: input, shape index: {}]
  %s2 = inlined_call_operand.vmem [shape: f32[8,32], index: 2, kind: input, shape index: {}]
  %s3 = inlined_call_operand.vmem [shape: f32[8,128], index: 3, kind: output, shape index: {}]
  %s4 = sld [smem:[#allocation0]]
  $region22: #{_lambda_.1} parent=0
    _
  %s6 = ssub.s32 1, %s4
  %s7 = scalar_select 0, %s6, %s4
  // Predicated region
  $region2: #{_lambda_.1} parent=0 // pred_check
    _
  $region3: #{_lambda_.1} parent=0 // pred_check_branch
    %9 = sbr.rel (0) target = $region5
  $region4: #{_lambda_.1} parent=0 // pred_region
    _
  $region5: #{_lambda_.1} parent=0 // pred_fallthru
    _
  // Predicated region
  $region6: #{_lambda_.1} parent=0 // pred_check
    _
  $region7: #{_lambda_.1} parent=0 // pred_check_branch
    %11 = sbr.rel (0) target = $region9
  $region8: #{_lambda_.1} parent=0 // pred_region
    _
  $region9: #{_lambda_.1} parent=0 // pred_fallthru
    _
  // Predicated region
  $region10: #{_lambda_.1} parent=0 // pred_check
    _
  $region11: #{_lambda_.1} parent=0 // pred_check_branch
    %13 = sbr.rel (0) target = $region13
  $region12: #{_lambda_.1} parent=0 // pred_region
    _
  $region13: #{_lambda_.1} parent=0 // pred_fallthru
    _
  %v16 = vld [vmem:[%s1] sm:$0xff]
  %v17 = vld [vmem:[%s2] sm:$0xff]
  %v18 = vld [vmem:[%s0] sm:$0xff]
  %vm19 = vcmask 261120
  %v20 = vsel %vm19, %v17, 0.0
  %21 = vadd.xlane.f32.xlu0 %v20
  %v22 = vpop.xlane.xlu0 %21
  %vm23 = vcmp.ne.f32.partialorder %v22, 0.0
  %v24 = vsel %vm23, 1, 0
  %v25 = vcvt.s32.f32 %v24
  %v26 = vsub.f32 %v16, %v17
  %v27 = vmul.f32 %v26, %v26
  %v28 = vsel %vm19, %v27, 0.0
  %29 = vadd.xlane.f32.xlu0 %v28
  %v30 = vpop.xlane.xlu0 %29
  %v31 = vmul.f32 %v30, 0.03125
  %v32 = vmul.f32 %v18, %v25
  %v33 = vmul.f32 %v32, %v31
  %v34 = vadd.f32 %v33, 0.0
  %vm35 = vcmask 7168
  %v36 = vsel %vm35, %v34, 0.0
  %v37 = vrot.slane %v36, 4
  %v38 = vadd.f32 %v36, %v37
  %v39 = vrot.slane %v38, 2
  %v40 = vadd.f32 %v38, %v39
  %v41 = vrot.slane %v40, 1
  %v42 = vadd.f32 %v40, %v41
  %v43 = vadd.f32 %v32, 0.0
  %v44 = vsel %vm35, %v43, 0.0
  %v45 = vrot.slane %v44, 4
  %v46 = vadd.f32 %v44, %v45
  %v47 = vrot.slane %v46, 2
  %v48 = vadd.f32 %v46, %v47
  %v49 = vrot.slane %v48, 1
  %v50 = vadd.f32 %v48, %v49
  %v51 = vadd.f32 %v50, 1e-10
  %v52 = vrcp.pop %v51
  %v53 = vmul.f32 %v42, %v52
  %v54 = vpack.c.bf16 %v16, %v16
  %v55 = vpack.c.bf16 %v17, %v17
  %v57 = vsel %vm19, %v54, 0
  %v60 = vsel %vm19, %v55, 0
  %62 = vmatprep.subr.bf16.mxu0 0
  %63 = vmatpush1.bf16.xpose.msra.mxu0 %v60
  %64 = vmatprep.subr.bf16.mxu0 0
  %65 = vmatpush1.bf16.xpose.msra.mxu0 0
  %66 = vmatprep.subr.bf16.mxu0 0
  %67 = vmatpush1.bf16.xpose.msra.mxu0 0
  %68 = vmatprep.subr.bf16.mxu0 0
  %69 = vmatpush1.bf16.xpose.msra.mxu0 0
  %70 = vmatprep.subr.bf16.mxu0 0
  %71 = vmatpush1.bf16.xpose.msra.mxu0 0
  %72 = vmatprep.subr.bf16.mxu0 0
  %73 = vmatpush1.bf16.xpose.msra.mxu0 0
  %74 = vmatprep.subr.bf16.mxu0 0
  %75 = vmatpush1.bf16.xpose.msra.mxu0 0
  %76 = vmatprep.subr.bf16.mxu0 0
  %77 = vmatpush1.bf16.xpose.msra.mxu0 0
  %78 = vmatprep.subr.bf16.mxu0 0
  %79 = vmatpush1.bf16.xpose.msra.mxu0 0
  %80 = vmatprep.subr.bf16.mxu0 0
  %81 = vmatpush1.bf16.xpose.msra.mxu0 0
  %82 = vmatprep.subr.bf16.mxu0 0
  %83 = vmatpush1.bf16.xpose.msra.mxu0 0
  %84 = vmatprep.subr.bf16.mxu0 0
  %85 = vmatpush1.bf16.xpose.msra.mxu0 0
  %86 = vmatprep.subr.bf16.mxu0 0
  %87 = vmatpush1.bf16.xpose.msra.mxu0 0
  %88 = vmatprep.subr.bf16.mxu0 0
  %89 = vmatpush1.bf16.xpose.msra.mxu0 0
  %90 = vmatprep.subr.bf16.mxu0 0
  %91 = vmatpush1.bf16.xpose.msra.mxu0 0
  %92 = vmatprep.subr.bf16.mxu0 0
  %93 = vmatpush1.bf16.xpose.msra.mxu0 0
  %94 = vmatprep.mubr.bf16.mxu0 0
  %95 = vmatmul.mubr.bf16.gmra.mrb[0].mxu0 %v57
  %v96 = vpop.f32.mrb[0].mxu0
  %v97 = vadd.f32 0.0, %v96
  %v98 = vpop.f32.mrb[0].mxu0
  %v99 = vpop.f32.mrb[0].mxu0
  %v100 = vpop.f32.mrb[0].mxu0
  %101 = vdwg.mxu0
  %v102 = vmul.f32 %v17, %v17
  %v103 = vpack.c.bf16 %v102, %v102
  %v105 = vsel %vm19, 1065369472, 0
  %v108 = vsel %vm19, %v103, 0
  %110 = vmatprep.subr.bf16.mxu0 0
  %111 = vmatpush1.bf16.xpose.msra.mxu0 %v108
  %112 = vmatprep.subr.bf16.mxu0 0
  %113 = vmatpush1.bf16.xpose.msra.mxu0 0
  %114 = vmatprep.subr.bf16.mxu0 0
  %115 = vmatpush1.bf16.xpose.msra.mxu0 0
  %116 = vmatprep.subr.bf16.mxu0 0
  %117 = vmatpush1.bf16.xpose.msra.mxu0 0
  %118 = vmatprep.subr.bf16.mxu0 0
  %119 = vmatpush1.bf16.xpose.msra.mxu0 0
  %120 = vmatprep.subr.bf16.mxu0 0
  %121 = vmatpush1.bf16.xpose.msra.mxu0 0
  %122 = vmatprep.subr.bf16.mxu0 0
  %123 = vmatpush1.bf16.xpose.msra.mxu0 0
  %124 = vmatprep.subr.bf16.mxu0 0
  %125 = vmatpush1.bf16.xpose.msra.mxu0 0
  %126 = vmatprep.subr.bf16.mxu0 0
  %127 = vmatpush1.bf16.xpose.msra.mxu0 0
  %128 = vmatprep.subr.bf16.mxu0 0
  %129 = vmatpush1.bf16.xpose.msra.mxu0 0
  %130 = vmatprep.subr.bf16.mxu0 0
  %131 = vmatpush1.bf16.xpose.msra.mxu0 0
  %132 = vmatprep.subr.bf16.mxu0 0
  %133 = vmatpush1.bf16.xpose.msra.mxu0 0
  %134 = vmatprep.subr.bf16.mxu0 0
  %135 = vmatpush1.bf16.xpose.msra.mxu0 0
  %136 = vmatprep.subr.bf16.mxu0 0
  %137 = vmatpush1.bf16.xpose.msra.mxu0 0
  %138 = vmatprep.subr.bf16.mxu0 0
  %139 = vmatpush1.bf16.xpose.msra.mxu0 0
  %140 = vmatprep.subr.bf16.mxu0 0
  %141 = vmatpush1.bf16.xpose.msra.mxu0 0
  %142 = vmatprep.mubr.bf16.mxu0 0
  %143 = vmatmul.mubr.bf16.gmra.mrb[0].mxu0 %v105
  %v144 = vpop.f32.mrb[0].mxu0
  %v145 = vadd.f32 0.0, %v144
  %v146 = vpop.f32.mrb[0].mxu0
  %v147 = vpop.f32.mrb[0].mxu0
  %v148 = vpop.f32.mrb[0].mxu0
  %149 = vdwg.mxu0
  %150 = vmatprep.subr.bf16.mxu0 0
  %151 = vmatpush1.bf16.xpose.msra.mxu0 %v60
  %152 = vmatprep.subr.bf16.mxu0 0
  %153 = vmatpush1.bf16.xpose.msra.mxu0 0
  %154 = vmatprep.subr.bf16.mxu0 0
  %155 = vmatpush1.bf16.xpose.msra.mxu0 0
  %156 = vmatprep.subr.bf16.mxu0 0
  %157 = vmatpush1.bf16.xpose.msra.mxu0 0
  %158 = vmatprep.subr.bf16.mxu0 0
  %159 = vmatpush1.bf16.xpose.msra.mxu0 0
  %160 = vmatprep.subr.bf16.mxu0 0
  %161 = vmatpush1.bf16.xpose.msra.mxu0 0
  %162 = vmatprep.subr.bf16.mxu0 0
  %163 = vmatpush1.bf16.xpose.msra.mxu0 0
  %164 = vmatprep.subr.bf16.mxu0 0
  %165 = vmatpush1.bf16.xpose.msra.mxu0 0
  %166 = vmatprep.subr.bf16.mxu0 0
  %167 = vmatpush1.bf16.xpose.msra.mxu0 0
  %168 = vmatprep.subr.bf16.mxu0 0
  %169 = vmatpush1.bf16.xpose.msra.mxu0 0
  %170 = vmatprep.subr.bf16.mxu0 0
  %171 = vmatpush1.bf16.xpose.msra.mxu0 0
  %172 = vmatprep.subr.bf16.mxu0 0
  %173 = vmatpush1.bf16.xpose.msra.mxu0 0
  %174 = vmatprep.subr.bf16.mxu0 0
  %175 = vmatpush1.bf16.xpose.msra.mxu0 0
  %176 = vmatprep.subr.bf16.mxu0 0
  %177 = vmatpush1.bf16.xpose.msra.mxu0 0
  %178 = vmatprep.subr.bf16.mxu0 0
  %179 = vmatpush1.bf16.xpose.msra.mxu0 0
  %180 = vmatprep.subr.bf16.mxu0 0
  %181 = vmatpush1.bf16.xpose.msra.mxu0 0
  %182 = vmatprep.mubr.bf16.mxu0 0
  %183 = vmatmul.mubr.bf16.gmra.mrb[0].mxu0 %v105
  %v184 = vpop.f32.mrb[0].mxu0
  %v185 = vadd.f32 0.0, %v184
  %v186 = vpop.f32.mrb[0].mxu0
  %v187 = vpop.f32.mrb[0].mxu0
  %v188 = vpop.f32.mrb[0].mxu0
  %189 = vdwg.mxu0
  %vm190 = vcmp.ne.f32.partialorder %v185, 0.0
  %v191 = vsel %vm190, 1, 0
  %v192 = vcvt.s32.f32 %v191
  %v193 = vmul.f32 %v16, %v16
  %v194 = vsel %vm19, %v193, 0.0
  %195 = vadd.xlane.f32.xlu0 %v194
  %v196 = vpop.xlane.xlu0 %195
  %v197 = vlaneseq
  %v198 = vshrl.u32 %v197, 7
  %v199 = vsub.s32 0, %v198
  %v200 = vrot.slane %v145, %v199
  %v201 = vadd.f32 %v196, %v200
  %v202 = vmul.f32 %v97, 2.0
  %v203 = vsub.f32 %v201, %v202
  %v204 = vmul.f32 %v203, 0.03125
  %v205 = vmax.f32 %v204, 0.0
  %v206 = vrsqrt.pop %v205
  %v207 = vmul.f32 %v205, %v206
  %vm208 = vcmp.eq.f32.partialorder %v205, inf
  %v209 = vsel %vm208, %v205, %v207
  %vm210 = vcmp.eq.f32.partialorder %v205, 0.0
  %v211 = vand.u32 %v205, 2147483648
  %v212 = vsel %vm210, %v211, %v209
  %v213 = vsub.f32 1.0, %v212
  %v214 = vmax.f32 %v213, 0.0
  %v215 = vmul.f32 %v213, %v213
  %v216 = vmul.f32 %v214, %v214
  %v217 = vmul.f32 %v215, %v216
  %219 = vset.pattern.permute.xlu0 0
  %220 = vperm.xlu0 %219, %v18
  %v221 = vpop.permute.xlu0 %220
  %v223 = vmul.f32 %v217, %v221
  %v224 = vlaneseq
  %v225 = vshrl.u32 %v224, 7
  %v226 = vsub.s32 0, %v225
  %v227 = vrot.slane %v192, %v226
  %v228 = vmul.f32 %v223, %v227
  %vm229 = vcmask 64512
  %v230 = vsel %vm229, %v228, 0.0
  %231 = vadd.xlane.f32.xlu0 %v230
  %v232 = vpop.xlane.xlu0 %231
  %v233 = vrot.slane %v232, 4
  %v234 = vadd.f32 %v232, %v233
  %v235 = vrot.slane %v234, 2
  %v236 = vadd.f32 %v234, %v235
  %v237 = vrot.slane %v236, 1
  %v238 = vadd.f32 %v236, %v237
  %v239 = vmax.f32 %v31, 0.0
  %v240 = vrsqrt.pop %v239
  %v241 = vmul.f32 %v239, %v240
  %vm242 = vcmp.eq.f32.partialorder %v239, inf
  %v243 = vsel %vm242, %v239, %v241
  %vm244 = vcmp.eq.f32.partialorder %v239, 0.0
  %v245 = vand.u32 %v239, 2147483648
  %v246 = vsel %vm244, %v245, %v243
  %v247 = vsub.f32 1.0, %v246
  %v248 = vmax.f32 %v247, 0.0
  %v249 = vmul.f32 %v247, %v247
  %v250 = vmul.f32 %v248, %v248
  %v251 = vmul.f32 %v249, %v250
  %v252 = vmul.f32 %v32, %v251
  %v253 = vadd.f32 %v252, 0.0
  %v254 = vsel %vm35, %v253, 0.0
  %v255 = vrot.slane %v254, 4
  %v256 = vadd.f32 %v254, %v255
  %v257 = vrot.slane %v256, 2
  %v258 = vadd.f32 %v256, %v257
  %v259 = vrot.slane %v258, 1
  %v260 = vadd.f32 %v258, %v259
  %v261 = vsub.f32 %v238, %v260
  %v262 = vadd.f32 %v18, 0.0
  %v263 = vsel %vm35, %v262, 0.0
  %v264 = vrot.slane %v263, 4
  %v265 = vadd.f32 %v263, %v264
  %v266 = vrot.slane %v265, 2
  %v267 = vadd.f32 %v265, %v266
  %v268 = vrot.slane %v267, 1
  %v269 = vadd.f32 %v267, %v268
  %v270 = vadd.f32 %v25, 0.0
  %v271 = vrot.slane %v270, 4
  %v272 = vadd.f32 %v270, %v271
  %v273 = vrot.slane %v272, 2
  %v274 = vadd.f32 %v272, %v273
  %v275 = vrot.slane %v274, 1
  %v276 = vadd.f32 %v274, %v275
  %v277 = vmul.f32 %v269, %v276
  %v278 = vsub.f32 %v277, %v50
  %v279 = vadd.f32 %v278, 1e-10
  %v280 = vrcp.pop %v279
  %v281 = vmul.f32 %v261, %v280
  %282 = vst [vmem:[%s3] sm:$0xff] 0.0
  %vm283 = vcmask 0
  %284 = vst.msk [vmem:[%s3] sm:$0x1] %vm283, %v53
  %286 = vrot.lane.b32.xlu0 %v281, 1
  %v287 = vpop.permute.xlu0 %286
  %vm289 = vcmask 8200
  %290 = vst.msk [vmem:[%s3] sm:$0x1] %vm289, %v287
  // Predicated region
  $region14: #{_lambda_.1} parent=0 // pred_check
    _
  $region15: #{_lambda_.1} parent=0 // pred_check_branch
    %292 = sbr.rel (0) target = $region17
  $region16: #{_lambda_.1} parent=0 // pred_region
    _
  $region17: #{_lambda_.1} parent=0 // pred_fallthru
    _
  // Predicated region
  $region18: #{_lambda_.1} parent=0 // pred_check
    _
  $region19: #{_lambda_.1} parent=0 // pred_check_branch
    %294 = sbr.rel (0) target = $region21
  $region20: #{_lambda_.1} parent=0 // pred_region
    _
  $region21: #{_lambda_.1} parent=0 // pred_fallthru
    _

</llo_original>
